<compile_context>
chip_gen: v6e
topology: v6e:2x2x1
jax: 0.10.0
libtpu: 0.0.40
codegen_flags: <defaults>
</compile_context>

<pallas_src>
import jax
import jax.numpy as jnp
from jax.experimental import pallas as pl
from jax.experimental.pallas import tpu as pltpu


def _fused_elementwise_kernel(x_ref, m_ref, o_ref):
    x = x_ref[...]
    m = m_ref[...]
    # Algebraic fold: (x*0.5)*(2*m) + 3*(9*m) == m*(x + 27)
    # (changes fp evaluation order vs. the reference only in the last ulps)
    s = (x + 27.0) * m
    # NOTE: jax.lax.erf lowers to a short VPU polynomial in Mosaic; fine at
    # this size.  If this body ever scales up and becomes VALU-bound, switch
    # to a tanh-based approximation (single EUP op).
    g = jax.lax.erf(7.0 * m) + 1.0
    o_ref[...] = s * g


@jax.jit
def fused_forward(input_tensor, mlp_input_tensor):
    assert input_tensor.shape == mlp_input_tensor.shape
    assert input_tensor.dtype == mlp_input_tensor.dtype

    # Gridless call: each operand is DMA'd once into VMEM as a single
    # full-array block, the body runs once, result is DMA'd back.  No grid,
    # no index_maps, no pipeline bookkeeping, no dimension_semantics.
    return pl.pallas_call(
        _fused_elementwise_kernel,
        out_shape=jax.ShapeDtypeStruct(input_tensor.shape, input_tensor.dtype),
        in_specs=[
            pl.BlockSpec(memory_space=pltpu.MemorySpace.VMEM),
            pl.BlockSpec(memory_space=pltpu.MemorySpace.VMEM),
        ],
        out_specs=pl.BlockSpec(memory_space=pltpu.MemorySpace.VMEM),
    )(input_tensor, mlp_input_tensor)


def reference_forward(input_tensor, mlp_input_tensor):
    v0 = input_tensor * 0.5
    v1 = 2 * mlp_input_tensor
    v2 = v0 * v1
    v3 = 9 * mlp_input_tensor
    v4 = 3 * v3
    v5 = v2 + v4
    v6 = 7 * mlp_input_tensor
    v7 = jax.lax.erf(v6)
    v8 = v7 + 1
    return v5 * v8


if __name__ == "__main__":
    key = jax.random.PRNGKey(0)
    k1, k2 = jax.random.split(key)
    # shapes consistent with the module's example inputs
    input_tensor = jax.random.normal(k1, (1, 3, 64, 64), dtype=jnp.float32)
    mlp_input_tensor = jax.random.normal(k2, (1, 3, 64, 64), dtype=jnp.float32)

    out = fused_forward(input_tensor, mlp_input_tensor)
    out = jax.block_until_ready(out)

    ref = reference_forward(input_tensor, mlp_input_tensor)
    assert out.shape == (1, 3, 64, 64)
    assert jnp.allclose(out, ref, atol=1e-5, rtol=1e-5)

    print("KERNEL_OK")
</pallas_src>

<mosaic_0001>
module attributes {stable_mosaic.version = 11 : i64} {
  func.func @_fused_elementwise_kernel(%arg0: memref<1x3x64x64xf32, #tpu.memory_space<vmem>>, %arg1: memref<1x3x64x64xf32, #tpu.memory_space<vmem>>, %arg2: memref<1x3x64x64xf32, #tpu.memory_space<vmem>>) attributes {dimension_semantics = [], scalar_prefetch = 0 : i64, scratch_operands = 0 : i64, tpu.core_type = #tpu.core_type<tc>} {
    %c0 = arith.constant 0 : index
    %c0_0 = arith.constant 0 : index
    %c0_1 = arith.constant 0 : index
    %c0_2 = arith.constant 0 : index
    %0 = vector.load %arg0[%c0, %c0_0, %c0_1, %c0_2] : memref<1x3x64x64xf32, #tpu.memory_space<vmem>>, vector<1x3x64x64xf32>
    %c0_3 = arith.constant 0 : index
    %c0_4 = arith.constant 0 : index
    %c0_5 = arith.constant 0 : index
    %c0_6 = arith.constant 0 : index
    %1 = vector.load %arg1[%c0_3, %c0_4, %c0_5, %c0_6] : memref<1x3x64x64xf32, #tpu.memory_space<vmem>>, vector<1x3x64x64xf32>
    %cst = arith.constant 2.700000e+01 : f32
    %2 = vector.broadcast %cst : f32 to vector<1x3x64x64xf32>
    %3 = arith.addf %0, %2 : vector<1x3x64x64xf32>
    %4 = arith.mulf %3, %1 : vector<1x3x64x64xf32>
    %cst_7 = arith.constant 7.000000e+00 : f32
    %5 = vector.broadcast %cst_7 : f32 to vector<1x3x64x64xf32>
    %6 = arith.mulf %5, %1 : vector<1x3x64x64xf32>
    %7 = math.erf %6 : vector<1x3x64x64xf32>
    %cst_8 = arith.constant 1.000000e+00 : f32
    %8 = vector.broadcast %cst_8 : f32 to vector<1x3x64x64xf32>
    %9 = arith.addf %7, %8 : vector<1x3x64x64xf32>
    %10 = arith.mulf %4, %9 : vector<1x3x64x64xf32>
    %c0_9 = arith.constant 0 : index
    %c0_10 = arith.constant 0 : index
    %c0_11 = arith.constant 0 : index
    %c0_12 = arith.constant 0 : index
    %11 = vector.load %arg2[%c0_9, %c0_10, %c0_11, %c0_12] : memref<1x3x64x64xf32, #tpu.memory_space<vmem>>, vector<1x3x64x64xf32>
    tpu.vector_store %arg2[%c0_9, %c0_10, %c0_11, %c0_12], %10 {strides = array<i32>} : memref<1x3x64x64xf32, #tpu.memory_space<vmem>>, vector<1x3x64x64xf32>,
    return
  }
}

</mosaic_0001>

<llo_original>
// kernel: fused_forward.1
$region0: #{fused_forward.1}
  #allocation0 [shape = 'u32[]', space=smem, size = 0x4, offset = 0x4, fixed_abs, tag = 'smem constant byte address 0x4 - core index']
  #allocation1 [shape = 'u32[144,128]{1,0:T(1,128)}', space=vmem, size = 0x12000, scoped, tag = 'internal scratch']
  %s0 = inlined_call_operand.hbm [shape: f32[1,3,64,64], index: 0, kind: input, shape index: {}]
  %s1 = inlined_call_operand.hbm [shape: f32[1,3,64,64], index: 1, kind: input, shape index: {}]
  %s2 = inlined_call_operand.hbm [shape: f32[1,3,64,64], index: 2, kind: output, shape index: {}]
  %s3 = sld [smem:[#allocation0]]
  $region26: #{fused_forward.1} parent=0
    _
  %s5 = ssub.s32 1, %s3
  %s6 = scalar_select 0, %s5, %s3
  $region1: #{fused_forward.1} parent=0
    #allocation2 [shape = 'u8[98304]{0}', space=vmem, size = 0x18000, scoped, tag = 'input window, operand 0, single buffered']
    #allocation3 [shape = 's32[1]{0}', space=sflag, size = 0x4, scoped, tag = 'scoped memory for fused_forward.1']
    #allocation4 [shape = 's32[1]{0}', space=sflag, size = 0x4, scoped, tag = 'scoped memory for fused_forward.1']
    #allocation5 [shape = 'u8[98304]{0}', space=vmem, size = 0x18000, scoped, tag = 'input window, operand 1, single buffered']
    #allocation6 [shape = 's32[1]{0}', space=sflag, size = 0x4, scoped, tag = 'scoped memory for fused_forward.1']
    #allocation7 [shape = 'u8[98304]{0}', space=vmem, size = 0x18000, scoped, tag = 'output window, operand 0, single buffered']
    %7 = vsyncpa [#allocation3], 0
    %8 = vsyncpa [#allocation6], 0
    %9 = vsyncpa [#allocation4], 0
    // Predicated region
    $region2: #{fused_forward.1} parent=1 // pred_check
      _
    $region3: #{fused_forward.1} parent=1 // pred_check_branch
      %11 = sbr.rel (0) target = $region5
    $region4: #{fused_forward.1} parent=1 // pred_region
      %s13 = ssub.s32 3072, 3072
      %14 = vsyncadd [#allocation3], %s13
      %s15 = sshll.u32 [#allocation2], 4
      %s16 = int_to_ptr.vmem [resolvable:$true] %s15
      %21 = dma.hbm_to_vmem [thread:$0]  %s0, 3072, %s16, [#allocation3], 128, 128, 8
    $region5: #{fused_forward.1} parent=1 // pred_fallthru
      _
    // Predicated region
    $region6: #{fused_forward.1} parent=1 // pred_check
      _
    $region7: #{fused_forward.1} parent=1 // pred_check_branch
      %23 = sbr.rel (0) target = $region9
    $region8: #{fused_forward.1} parent=1 // pred_region
      %s25 = ssub.s32 3072, 3072
      %26 = vsyncadd [#allocation6], %s25
      %s27 = sshll.u32 [#allocation5], 4
      %s28 = int_to_ptr.vmem [resolvable:$true] %s27
      %33 = dma.hbm_to_vmem [thread:$0]  %s1, 3072, %s28, [#allocation6], 128, 128, 8
    $region9: #{fused_forward.1} parent=1 // pred_fallthru
      _
    // Predicated region
    $region10: #{fused_forward.1} parent=1 // pred_check
      _
    $region11: #{fused_forward.1} parent=1 // pred_check_branch
      %35 = sbr.rel (0) target = $region13
    $region12: #{fused_forward.1} parent=1 // pred_region
      %36 = dma.done [#allocation3], 3072
    $region13: #{fused_forward.1} parent=1 // pred_fallthru
      _
    // Predicated region
    $region14: #{fused_forward.1} parent=1 // pred_check
      _
    $region15: #{fused_forward.1} parent=1 // pred_check_branch
      %38 = sbr.rel (0) target = $region17
    $region16: #{fused_forward.1} parent=1 // pred_region
      %39 = dma.done [#allocation6], 3072
    $region17: #{fused_forward.1} parent=1 // pred_fallthru
      _
    %v40 = vld [vmem:[#allocation2] sm:$0xff]
    %v41 = vld [vmem:[#allocation2 + $0x8] sm:$0xff]
    %v42 = vld [vmem:[#allocation2 + $0x10] sm:$0xff]
    %v43 = vld [vmem:[#allocation2 + $0x18] sm:$0xff]
    %v44 = vld [vmem:[#allocation2 + $0x20] sm:$0xff]
    %v45 = vld [vmem:[#allocation2 + $0x28] sm:$0xff]
    %v46 = vld [vmem:[#allocation2 + $0x30] sm:$0xff]
    %v47 = vld [vmem:[#allocation2 + $0x38] sm:$0xff]
    %v48 = vld [vmem:[#allocation2 + $0x40] sm:$0xff]
    %v49 = vld [vmem:[#allocation2 + $0x48] sm:$0xff]
    %v50 = vld [vmem:[#allocation2 + $0x50] sm:$0xff]
    %v51 = vld [vmem:[#allocation2 + $0x58] sm:$0xff]
    %v52 = vld [vmem:[#allocation2 + $0x60] sm:$0xff]
    %v53 = vld [vmem:[#allocation2 + $0x68] sm:$0xff]
    %v54 = vld [vmem:[#allocation2 + $0x70] sm:$0xff]
    %v55 = vld [vmem:[#allocation2 + $0x78] sm:$0xff]
    %v56 = vld [vmem:[#allocation2 + $0x80] sm:$0xff]
    %v57 = vld [vmem:[#allocation2 + $0x88] sm:$0xff]
    %v58 = vld [vmem:[#allocation2 + $0x90] sm:$0xff]
    %v59 = vld [vmem:[#allocation2 + $0x98] sm:$0xff]
    %v60 = vld [vmem:[#allocation2 + $0xa0] sm:$0xff]
    %v61 = vld [vmem:[#allocation2 + $0xa8] sm:$0xff]
    %v62 = vld [vmem:[#allocation2 + $0xb0] sm:$0xff]
    %v63 = vld [vmem:[#allocation2 + $0xb8] sm:$0xff]
    %v64 = vld [vmem:[#allocation5] sm:$0xff]
    %v65 = vld [vmem:[#allocation5 + $0x8] sm:$0xff]
    %v66 = vld [vmem:[#allocation5 + $0x10] sm:$0xff]
    %v67 = vld [vmem:[#allocation5 + $0x18] sm:$0xff]
    %v68 = vld [vmem:[#allocation5 + $0x20] sm:$0xff]
    %v69 = vld [vmem:[#allocation5 + $0x28] sm:$0xff]
    %v70 = vld [vmem:[#allocation5 + $0x30] sm:$0xff]
    %v71 = vld [vmem:[#allocation5 + $0x38] sm:$0xff]
    %v72 = vld [vmem:[#allocation5 + $0x40] sm:$0xff]
    %v73 = vld [vmem:[#allocation5 + $0x48] sm:$0xff]
    %v74 = vld [vmem:[#allocation5 + $0x50] sm:$0xff]
    %v75 = vld [vmem:[#allocation5 + $0x58] sm:$0xff]
    %v76 = vld [vmem:[#allocation5 + $0x60] sm:$0xff]
    %v77 = vld [vmem:[#allocation5 + $0x68] sm:$0xff]
    %v78 = vld [vmem:[#allocation5 + $0x70] sm:$0xff]
    %v79 = vld [vmem:[#allocation5 + $0x78] sm:$0xff]
    %v80 = vld [vmem:[#allocation5 + $0x80] sm:$0xff]
    %v81 = vld [vmem:[#allocation5 + $0x88] sm:$0xff]
    %v82 = vld [vmem:[#allocation5 + $0x90] sm:$0xff]
    %v83 = vld [vmem:[#allocation5 + $0x98] sm:$0xff]
    %v84 = vld [vmem:[#allocation5 + $0xa0] sm:$0xff]
    %v85 = vld [vmem:[#allocation5 + $0xa8] sm:$0xff]
    %v86 = vld [vmem:[#allocation5 + $0xb0] sm:$0xff]
    %v87 = vld [vmem:[#allocation5 + $0xb8] sm:$0xff]
    %v88 = vadd.f32 %v40, 27.0
    %v89 = vadd.f32 %v41, 27.0
    %v90 = vadd.f32 %v42, 27.0
    %v91 = vadd.f32 %v43, 27.0
    %v92 = vadd.f32 %v44, 27.0
    %v93 = vadd.f32 %v45, 27.0
    %v94 = vadd.f32 %v46, 27.0
    %v95 = vadd.f32 %v47, 27.0
    %v96 = vadd.f32 %v48, 27.0
    %v97 = vadd.f32 %v49, 27.0
    %v98 = vadd.f32 %v50, 27.0
    %v99 = vadd.f32 %v51, 27.0
    %v100 = vadd.f32 %v52, 27.0
    %v101 = vadd.f32 %v53, 27.0
    %v102 = vadd.f32 %v54, 27.0
    %v103 = vadd.f32 %v55, 27.0
    %v104 = vadd.f32 %v56, 27.0
    %v105 = vadd.f32 %v57, 27.0
    %v106 = vadd.f32 %v58, 27.0
    %v107 = vadd.f32 %v59, 27.0
    %v108 = vadd.f32 %v60, 27.0
    %v109 = vadd.f32 %v61, 27.0
    %v110 = vadd.f32 %v62, 27.0
    %v111 = vadd.f32 %v63, 27.0
    %v112 = vmul.f32 %v88, %v64
    %v113 = vmul.f32 %v89, %v65
    %v114 = vmul.f32 %v90, %v66
    %v115 = vmul.f32 %v91, %v67
    %v116 = vmul.f32 %v92, %v68
    %v117 = vmul.f32 %v93, %v69
    %v118 = vmul.f32 %v94, %v70
    %v119 = vmul.f32 %v95, %v71
    %v120 = vmul.f32 %v96, %v72
    %v121 = vmul.f32 %v97, %v73
    %v122 = vmul.f32 %v98, %v74
    %v123 = vmul.f32 %v99, %v75
    %v124 = vmul.f32 %v100, %v76
    %v125 = vmul.f32 %v101, %v77
    %v126 = vmul.f32 %v102, %v78
    %v127 = vmul.f32 %v103, %v79
    %v128 = vmul.f32 %v104, %v80
    %v129 = vmul.f32 %v105, %v81
    %v130 = vmul.f32 %v106, %v82
    %v131 = vmul.f32 %v107, %v83
    %v132 = vmul.f32 %v108, %v84
    %v133 = vmul.f32 %v109, %v85
    %v134 = vmul.f32 %v110, %v86
    %v135 = vmul.f32 %v111, %v87
    %v136 = vmul.f32 %v64, 7.0
    %v137 = vmul.f32 %v65, 7.0
    %v138 = vmul.f32 %v66, 7.0
    %v139 = vmul.f32 %v67, 7.0
    %v140 = vmul.f32 %v68, 7.0
    %v141 = vmul.f32 %v69, 7.0
    %v142 = vmul.f32 %v70, 7.0
    %v143 = vmul.f32 %v71, 7.0
    %v144 = vmul.f32 %v72, 7.0
    %v145 = vmul.f32 %v73, 7.0
    %v146 = vmul.f32 %v74, 7.0
    %v147 = vmul.f32 %v75, 7.0
    %v148 = vmul.f32 %v76, 7.0
    %v149 = vmul.f32 %v77, 7.0
    %v150 = vmul.f32 %v78, 7.0
    %v151 = vmul.f32 %v79, 7.0
    %v152 = vmul.f32 %v80, 7.0
    %v153 = vmul.f32 %v81, 7.0
    %v154 = vmul.f32 %v82, 7.0
    %v155 = vmul.f32 %v83, 7.0
    %v156 = vmul.f32 %v84, 7.0
    %v157 = vmul.f32 %v85, 7.0
    %v158 = vmul.f32 %v86, 7.0
    %v159 = vmul.f32 %v87, 7.0
    %v160 = verf.f32.pop %v136
    %v161 = verf.f32.pop %v137
    %v162 = verf.f32.pop %v138
    %v163 = verf.f32.pop %v139
    %v164 = verf.f32.pop %v140
    %v165 = verf.f32.pop %v141
    %v166 = verf.f32.pop %v142
    %v167 = verf.f32.pop %v143
    %v168 = verf.f32.pop %v144
    %v169 = verf.f32.pop %v145
    %v170 = verf.f32.pop %v146
    %v171 = verf.f32.pop %v147
    %v172 = verf.f32.pop %v148
    %v173 = verf.f32.pop %v149
    %v174 = verf.f32.pop %v150
    %v175 = verf.f32.pop %v151
    %v176 = verf.f32.pop %v152
    %v177 = verf.f32.pop %v153
    %v178 = verf.f32.pop %v154
    %v179 = verf.f32.pop %v155
    %v180 = verf.f32.pop %v156
    %v181 = verf.f32.pop %v157
    %v182 = verf.f32.pop %v158
    %v183 = verf.f32.pop %v159
    %v184 = vadd.f32 %v160, 1.0
    %v185 = vadd.f32 %v161, 1.0
    %v186 = vadd.f32 %v162, 1.0
    %v187 = vadd.f32 %v163, 1.0
    %v188 = vadd.f32 %v164, 1.0
    %v189 = vadd.f32 %v165, 1.0
    %v190 = vadd.f32 %v166, 1.0
    %v191 = vadd.f32 %v167, 1.0
    %v192 = vadd.f32 %v168, 1.0
    %v193 = vadd.f32 %v169, 1.0
    %v194 = vadd.f32 %v170, 1.0
    %v195 = vadd.f32 %v171, 1.0
    %v196 = vadd.f32 %v172, 1.0
    %v197 = vadd.f32 %v173, 1.0
    %v198 = vadd.f32 %v174, 1.0
    %v199 = vadd.f32 %v175, 1.0
    %v200 = vadd.f32 %v176, 1.0
    %v201 = vadd.f32 %v177, 1.0
    %v202 = vadd.f32 %v178, 1.0
    %v203 = vadd.f32 %v179, 1.0
    %v204 = vadd.f32 %v180, 1.0
    %v205 = vadd.f32 %v181, 1.0
    %v206 = vadd.f32 %v182, 1.0
    %v207 = vadd.f32 %v183, 1.0
    %v208 = vmul.f32 %v112, %v184
    %v209 = vmul.f32 %v113, %v185
    %v210 = vmul.f32 %v114, %v186
    %v211 = vmul.f32 %v115, %v187
    %v212 = vmul.f32 %v116, %v188
    %v213 = vmul.f32 %v117, %v189
    %v214 = vmul.f32 %v118, %v190
    %v215 = vmul.f32 %v119, %v191
    %v216 = vmul.f32 %v120, %v192
    %v217 = vmul.f32 %v121, %v193
    %v218 = vmul.f32 %v122, %v194
    %v219 = vmul.f32 %v123, %v195
    %v220 = vmul.f32 %v124, %v196
    %v221 = vmul.f32 %v125, %v197
    %v222 = vmul.f32 %v126, %v198
    %v223 = vmul.f32 %v127, %v199
    %v224 = vmul.f32 %v128, %v200
    %v225 = vmul.f32 %v129, %v201
    %v226 = vmul.f32 %v130, %v202
    %v227 = vmul.f32 %v131, %v203
    %v228 = vmul.f32 %v132, %v204
    %v229 = vmul.f32 %v133, %v205
    %v230 = vmul.f32 %v134, %v206
    %v231 = vmul.f32 %v135, %v207
    %vm232 = vcmask 523264
    %233 = vst.msk [vmem:[#allocation7] sm:$0xff] %vm232, %v208
    %234 = vst.msk [vmem:[#allocation7 + $0x8] sm:$0xff] %vm232, %v209
    %235 = vst.msk [vmem:[#allocation7 + $0x10] sm:$0xff] %vm232, %v210
    %236 = vst.msk [vmem:[#allocation7 + $0x18] sm:$0xff] %vm232, %v211
    %237 = vst.msk [vmem:[#allocation7 + $0x20] sm:$0xff] %vm232, %v212
    %238 = vst.msk [vmem:[#allocation7 + $0x28] sm:$0xff] %vm232, %v213
    %239 = vst.msk [vmem:[#allocation7 + $0x30] sm:$0xff] %vm232, %v214
    %240 = vst.msk [vmem:[#allocation7 + $0x38] sm:$0xff] %vm232, %v215
    %241 = vst.msk [vmem:[#allocation7 + $0x40] sm:$0xff] %vm232, %v216
    %242 = vst.msk [vmem:[#allocation7 + $0x48] sm:$0xff] %vm232, %v217
    %243 = vst.msk [vmem:[#allocation7 + $0x50] sm:$0xff] %vm232, %v218
    %244 = vst.msk [vmem:[#allocation7 + $0x58] sm:$0xff] %vm232, %v219
    %245 = vst.msk [vmem:[#allocation7 + $0x60] sm:$0xff] %vm232, %v220
    %246 = vst.msk [vmem:[#allocation7 + $0x68] sm:$0xff] %vm232, %v221
    %247 = vst.msk [vmem:[#allocation7 + $0x70] sm:$0xff] %vm232, %v222
    %248 = vst.msk [vmem:[#allocation7 + $0x78] sm:$0xff] %vm232, %v223
    %249 = vst.msk [vmem:[#allocation7 + $0x80] sm:$0xff] %vm232, %v224
    %250 = vst.msk [vmem:[#allocation7 + $0x88] sm:$0xff] %vm232, %v225
    %251 = vst.msk [vmem:[#allocation7 + $0x90] sm:$0xff] %vm232, %v226
    %252 = vst.msk [vmem:[#allocation7 + $0x98] sm:$0xff] %vm232, %v227
    %253 = vst.msk [vmem:[#allocation7 + $0xa0] sm:$0xff] %vm232, %v228
    %254 = vst.msk [vmem:[#allocation7 + $0xa8] sm:$0xff] %vm232, %v229
    %255 = vst.msk [vmem:[#allocation7 + $0xb0] sm:$0xff] %vm232, %v230
    %256 = vst.msk [vmem:[#allocation7 + $0xb8] sm:$0xff] %vm232, %v231
    // Predicated region
    $region18: #{fused_forward.1} parent=1 // pred_check
      _
    $region19: #{fused_forward.1} parent=1 // pred_check_branch
      %258 = sbr.rel (0) target = $region21
    $region20: #{fused_forward.1} parent=1 // pred_region
      %s260 = ssub.s32 3072, 3072
      %261 = vsyncadd [#allocation4], %s260
      %s262 = sshll.u32 [#allocation7], 4
      %s263 = int_to_ptr.vmem [resolvable:$true] %s262
      %268 = dma.vmem_to_hbm [thread:$0]  %s263, 3072, %s2, [#allocation4], 128, 128, 8
    $region21: #{fused_forward.1} parent=1 // pred_fallthru
      _
    // Predicated region
    $region22: #{fused_forward.1} parent=1 // pred_check
      _
    $region23: #{fused_forward.1} parent=1 // pred_check_branch
      %270 = sbr.rel (0) target = $region25
    $region24: #{fused_forward.1} parent=1 // pred_region
      %271 = dma.done [#allocation4], 3072
    $region25: #{fused_forward.1} parent=1 // pred_fallthru
      _
    %272 = vsyncpa [#allocation3], 1
    %273 = vsyncpa [#allocation6], 1
    %274 = vsyncpa [#allocation4], 1

</llo_original>
